<compile_context>
chip_gen: v5e
topology: v5e:2x2
jax: 0.10.0
libtpu: 0.0.40
codegen_flags: <defaults>
</compile_context>

<pallas_src>
import jax
import jax.numpy as jnp
from jax.experimental import pallas as pl
from jax.experimental.pallas import tpu as pltpu


def dvn_kernel(feat_ref, adj_ref, w1_ref, b1_ref, w2_ref, b2_ref,
               wc_ref, bc_ref, out_ref):
    # feat_ref: (Bt, N, F)  adj_ref: (Bt, N, N)  out_ref: (Bt, N)
    Bt, N, F = feat_ref.shape
    H = w1_ref.shape[1]

    feat = feat_ref[...]
    adj = adj_ref[...]

    # ---- GNN layer 1: tanh(adj @ (feat @ W1 + b1)) ---------------------------
    # Flatten the graph batch so the weight matmul fills MXU rows:
    # (Bt*N, F) @ (F, H).  N is a multiple of 8 here, so the reshape is a
    # layout no-op (no relayout copy).
    seq1 = jnp.dot(feat.reshape(Bt * N, F), w1_ref[...],
                   preferred_element_type=jnp.float32) + b1_ref[...]
    h1 = jnp.tanh(jnp.einsum("bij,bjk->bik", adj, seq1.reshape(Bt, N, H),
                             preferred_element_type=jnp.float32))

    # ---- GNN layer 2: tanh(adj @ (h1 @ W2 + b2)) -----------------------------
    seq2 = jnp.dot(h1.reshape(Bt * N, H), w2_ref[...],
                   preferred_element_type=jnp.float32) + b2_ref[...]
    h2 = jnp.tanh(jnp.einsum("bij,bjk->bik", adj, seq2.reshape(Bt, N, H),
                             preferred_element_type=jnp.float32))

    # ---- Critic head: h2 @ Wc^T + bc as VPU mul + lane reduction -> (Bt, N) --
    # wc_ref is the torch (1, H) weight row; bc is a scalar in SMEM.
    out_ref[...] = jnp.sum(h2 * wc_ref[...], axis=-1) + bc_ref[0]


def dvn_forward(feat, adj, params, *, block_b=None):
    """feat: (B, N, F) f32, adj: (B, N, N) f32 -> (B, N, 1) f32."""
    B, N, F = feat.shape
    H = params["w1"].shape[1]

    if block_b is None:
        # Amortize per-step overhead over many graphs, but keep >= 2 grid steps
        # when possible so both v7x TensorCores get work (no effect on v5e/v6e).
        block_b = B
        for cand in (64, 32, 16, 8):
            if B % cand == 0 and B // cand >= 2:
                block_b = cand
                break
    assert B % block_b == 0, f"batch {B} must be divisible by block_b {block_b}"
    assert block_b == B or block_b % 8 == 0, (
        "output sublane tiling requires block_b % 8 == 0 (or block_b == B)")

    grid = (B // block_b,)
    const = lambda shape: pl.BlockSpec(shape, lambda b: (0,) * len(shape))

    out2d = pl.pallas_call(
        dvn_kernel,
        out_shape=jax.ShapeDtypeStruct((B, N), jnp.float32),
        grid_spec=pltpu.PrefetchScalarGridSpec(
            num_scalar_prefetch=0,
            grid=grid,
            in_specs=[
                pl.BlockSpec((block_b, N, F), lambda b: (b, 0, 0)),   # feat
                pl.BlockSpec((block_b, N, N), lambda b: (b, 0, 0)),   # adj
                const((F, H)),                                        # W1 (pre-transposed)
                const((1, H)),                                        # b1
                const((H, H)),                                        # W2 (pre-transposed)
                const((1, H)),                                        # b2
                const((1, H)),                                        # Wc (torch row weight)
                pl.BlockSpec(memory_space=pltpu.MemorySpace.SMEM),    # bc scalar
            ],
            out_specs=pl.BlockSpec((block_b, N), lambda b: (b, 0)),
        ),
        compiler_params=pltpu.CompilerParams(
            dimension_semantics=("parallel",)),
    )(feat, adj, params["w1"], params["b1"], params["w2"], params["b2"],
      params["wc"], params["bc"])

    # Restore the (B, N, 1) shape of the PyTorch module's output.
    return out2d[..., None]


def init_params(key, feat_size, hidden_size):
    """Deterministic synthetic init (stands in for PyTorch's init_ wrapper)."""
    ks = jax.random.split(key, 6)
    scale = 0.1
    return {
        # dense weights stored as (in_features, out_features) == W^T of torch Linear
        "w1": scale * jax.random.normal(ks[0], (feat_size, hidden_size), jnp.float32),
        "b1": scale * jax.random.normal(ks[1], (1, hidden_size), jnp.float32),
        "w2": scale * jax.random.normal(ks[2], (hidden_size, hidden_size), jnp.float32),
        "b2": scale * jax.random.normal(ks[3], (1, hidden_size), jnp.float32),
        # critic weight kept as the torch (1, hidden) row so the head is a
        # VPU multiply + lane reduction in the kernel
        "wc": scale * jax.random.normal(ks[4], (1, hidden_size), jnp.float32),
        "bc": scale * jax.random.normal(ks[5], (1,), jnp.float32),
    }


def dvn_reference(feat, adj, p):
    """Pure-JAX reference mirroring the PyTorch DVN forward."""
    seq1 = feat @ p["w1"] + p["b1"]
    h1 = jnp.tanh(jnp.einsum("bij,bjk->bik", adj, seq1))
    seq2 = h1 @ p["w2"] + p["b2"]
    h2 = jnp.tanh(jnp.einsum("bij,bjk->bik", adj, seq2))
    return h2 @ p["wc"].T + p["bc"]


if __name__ == "__main__":
    # Small shapes consistent with DVNAgent: N = num_nodes + num_agents.
    batch = 16                      # -> grid of 2 steps x 8 graphs each
    num_nodes, num_agents = 6, 2
    n = num_nodes + num_agents      # 8
    feat_size = 8
    hidden_size = 32

    key = jax.random.PRNGKey(0)
    k_feat, k_adj, k_param = jax.random.split(key, 3)

    feat = jax.random.normal(k_feat, (batch, n, feat_size), jnp.float32)
    # symmetric-ish 0/1 adjacency with self-loops, like a graph adjacency matrix
    adj_logits = jax.random.uniform(k_adj, (batch, n, n))
    adj = (adj_logits > 0.5).astype(jnp.float32)
    adj = jnp.maximum(adj, jnp.transpose(adj, (0, 2, 1)))
    adj = jnp.maximum(adj, jnp.eye(n, dtype=jnp.float32)[None])

    params = init_params(k_param, feat_size, hidden_size)

    out = dvn_forward(feat, adj, params)
    out = jax.block_until_ready(out)

    ref = dvn_reference(feat, adj, params)
    assert out.shape == (batch, n, 1)
    assert jnp.allclose(out, ref, atol=1e-5, rtol=1e-5), (
        f"max err {jnp.max(jnp.abs(out - ref))}")

    print("KERNEL_OK")
</pallas_src>

<mosaic_0001>
module attributes {stable_mosaic.version = 11 : i64} {
  func.func @dvn_kernel(%arg0: i32, %arg1: memref<8x8x8xf32, #tpu.memory_space<vmem>>, %arg2: memref<8x8x8xf32, #tpu.memory_space<vmem>>, %arg3: memref<8x32xf32, #tpu.memory_space<vmem>>, %arg4: memref<1x32xf32, #tpu.memory_space<vmem>>, %arg5: memref<32x32xf32, #tpu.memory_space<vmem>>, %arg6: memref<1x32xf32, #tpu.memory_space<vmem>>, %arg7: memref<1x32xf32, #tpu.memory_space<vmem>>, %arg8: memref<1xf32, #tpu.memory_space<smem>>, %arg9: memref<8x8xf32, #tpu.memory_space<vmem>>) attributes {dimension_semantics = [#tpu.dimension_semantics<parallel>], iteration_bounds = array<i64: 2>, scalar_prefetch = 0 : i64, scratch_operands = 0 : i64, tpu.core_type = #tpu.core_type<tc>, window_params = [{transform_indices = @transform_0, window_bounds = array<i64: 8, 8, 8>}, {transform_indices = @transform_1, window_bounds = array<i64: 8, 8, 8>}, {pipeline_mode = #tpu.pipeline_mode<synchronous>, transform_indices = @transform_2, window_bounds = array<i64: 8, 32>}, {pipeline_mode = #tpu.pipeline_mode<synchronous>, transform_indices = @transform_3, window_bounds = array<i64: 1, 32>}, {pipeline_mode = #tpu.pipeline_mode<synchronous>, transform_indices = @transform_4, window_bounds = array<i64: 32, 32>}, {pipeline_mode = #tpu.pipeline_mode<synchronous>, transform_indices = @transform_5, window_bounds = array<i64: 1, 32>}, {pipeline_mode = #tpu.pipeline_mode<synchronous>, transform_indices = @transform_6, window_bounds = array<i64: 1, 32>}, {transform_indices = @transform_7, window_bounds = array<i64: 1>}, {transform_indices = @transform_8, window_bounds = array<i64: 8, 8>}]} {
    %c0 = arith.constant 0 : index
    %c0_0 = arith.constant 0 : index
    %c0_1 = arith.constant 0 : index
    %0 = vector.load %arg1[%c0, %c0_0, %c0_1] : memref<8x8x8xf32, #tpu.memory_space<vmem>>, vector<8x8x8xf32>
    %c0_2 = arith.constant 0 : index
    %c0_3 = arith.constant 0 : index
    %c0_4 = arith.constant 0 : index
    %1 = vector.load %arg2[%c0_2, %c0_3, %c0_4] : memref<8x8x8xf32, #tpu.memory_space<vmem>>, vector<8x8x8xf32>
    %2 = vector.shape_cast %0 : vector<8x8x8xf32> to vector<64x8xf32>
    %c0_5 = arith.constant 0 : index
    %c0_6 = arith.constant 0 : index
    %3 = vector.load %arg3[%c0_5, %c0_6] : memref<8x32xf32, #tpu.memory_space<vmem>>, vector<8x32xf32>
    %cst = arith.constant dense<0.000000e+00> : vector<64x32xf32>
    %4 = tpu.matmul %2, %3, %cst {dimension_numbers = #tpu.dot_dimension_numbers<[1], [0], [0], [1], [0, 0, 1, 1], [], []>} : vector<64x8xf32>, vector<8x32xf32>, vector<64x32xf32> -> vector<64x32xf32>
    %c0_7 = arith.constant 0 : index
    %c0_8 = arith.constant 0 : index
    %5 = vector.load %arg4[%c0_7, %c0_8] : memref<1x32xf32, #tpu.memory_space<vmem>>, vector<1x32xf32>
    %6 = vector.broadcast %5 : vector<1x32xf32> to vector<64x32xf32>
    %7 = arith.addf %4, %6 : vector<64x32xf32>
    %8 = vector.shape_cast %7 : vector<64x32xf32> to vector<8x8x32xf32>
    "tpu.trace_start"() <{level = 10 : i32, message = "bij,bjk->bik"}> : () -> ()
    %cst_9 = arith.constant dense<0.000000e+00> : vector<8x8x32xf32>
    %9 = tpu.matmul %1, %8, %cst_9 {dimension_numbers = #tpu.dot_dimension_numbers<[2], [1], [1], [2], [0, 0, 0, 1, 1, 2], [0], [0]>} : vector<8x8x8xf32>, vector<8x8x32xf32>, vector<8x8x32xf32> -> vector<8x8x32xf32>
    "tpu.trace_stop"() : () -> ()
    %10 = math.tanh %9 : vector<8x8x32xf32>
    %11 = vector.shape_cast %10 : vector<8x8x32xf32> to vector<64x32xf32>
    %c0_10 = arith.constant 0 : index
    %c0_11 = arith.constant 0 : index
    %12 = vector.load %arg5[%c0_10, %c0_11] : memref<32x32xf32, #tpu.memory_space<vmem>>, vector<32x32xf32>
    %cst_12 = arith.constant dense<0.000000e+00> : vector<64x32xf32>
    %13 = tpu.matmul %11, %12, %cst_12 {dimension_numbers = #tpu.dot_dimension_numbers<[1], [0], [0], [1], [0, 0, 1, 1], [], []>} : vector<64x32xf32>, vector<32x32xf32>, vector<64x32xf32> -> vector<64x32xf32>
    %c0_13 = arith.constant 0 : index
    %c0_14 = arith.constant 0 : index
    %14 = vector.load %arg6[%c0_13, %c0_14] : memref<1x32xf32, #tpu.memory_space<vmem>>, vector<1x32xf32>
    %15 = vector.broadcast %14 : vector<1x32xf32> to vector<64x32xf32>
    %16 = arith.addf %13, %15 : vector<64x32xf32>
    %17 = vector.shape_cast %16 : vector<64x32xf32> to vector<8x8x32xf32>
    "tpu.trace_start"() <{level = 10 : i32, message = "bij,bjk->bik"}> : () -> ()
    %cst_15 = arith.constant dense<0.000000e+00> : vector<8x8x32xf32>
    %18 = tpu.matmul %1, %17, %cst_15 {dimension_numbers = #tpu.dot_dimension_numbers<[2], [1], [1], [2], [0, 0, 0, 1, 1, 2], [0], [0]>} : vector<8x8x8xf32>, vector<8x8x32xf32>, vector<8x8x32xf32> -> vector<8x8x32xf32>
    "tpu.trace_stop"() : () -> ()
    %19 = math.tanh %18 : vector<8x8x32xf32>
    %c0_16 = arith.constant 0 : index
    %c0_17 = arith.constant 0 : index
    %20 = vector.load %arg7[%c0_16, %c0_17] : memref<1x32xf32, #tpu.memory_space<vmem>>, vector<1x32xf32>
    %21 = vector.shape_cast %20 : vector<1x32xf32> to vector<1x1x32xf32>
    %22 = vector.broadcast %21 : vector<1x1x32xf32> to vector<8x8x32xf32>
    %23 = arith.mulf %19, %22 : vector<8x8x32xf32>
    %cst_18 = arith.constant dense<0.000000e+00> : vector<8x8xf32>
    %24 = vector.multi_reduction <add>, %23, %cst_18 [2] : vector<8x8x32xf32> to vector<8x8xf32>
    %c0_19 = arith.constant 0 : index
    %25 = memref.load %arg8[%c0_19] : memref<1xf32, #tpu.memory_space<smem>>
    %26 = vector.broadcast %25 : f32 to vector<8x8xf32>
    %27 = arith.addf %24, %26 : vector<8x8xf32>
    %c0_20 = arith.constant 0 : index
    %c0_21 = arith.constant 0 : index
    %28 = vector.load %arg9[%c0_20, %c0_21] : memref<8x8xf32, #tpu.memory_space<vmem>>, vector<8x8xf32>
    tpu.vector_store %arg9[%c0_20, %c0_21], %27 {strides = array<i32>} : memref<8x8xf32, #tpu.memory_space<vmem>>, vector<8x8xf32>,
    return
  }
  func.func @transform_0(%arg0: i32) -> (i32, i32, i32) {
    %c0_i32 = arith.constant 0 : i32
    %c0_i32_0 = arith.constant 0 : i32
    %c0_i32_1 = arith.constant 0 : i32
    return %arg0, %c0_i32, %c0_i32_0 : i32, i32, i32
  }
  func.func @transform_1(%arg0: i32) -> (i32, i32, i32) {
    %c0_i32 = arith.constant 0 : i32
    %c0_i32_0 = arith.constant 0 : i32
    %c0_i32_1 = arith.constant 0 : i32
    return %arg0, %c0_i32, %c0_i32_0 : i32, i32, i32
  }
  func.func @transform_2(%arg0: i32) -> (i32, i32) {
    %c0_i32 = arith.constant 0 : i32
    %c0_i32_0 = arith.constant 0 : i32
    %c0_i32_1 = arith.constant 0 : i32
    return %c0_i32, %c0_i32_0 : i32, i32
  }
  func.func @transform_3(%arg0: i32) -> (i32, i32) {
    %c0_i32 = arith.constant 0 : i32
    %c0_i32_0 = arith.constant 0 : i32
    %c0_i32_1 = arith.constant 0 : i32
    return %c0_i32, %c0_i32_0 : i32, i32
  }
  func.func @transform_4(%arg0: i32) -> (i32, i32) {
    %c0_i32 = arith.constant 0 : i32
    %c0_i32_0 = arith.constant 0 : i32
    %c0_i32_1 = arith.constant 0 : i32
    return %c0_i32, %c0_i32_0 : i32, i32
  }
  func.func @transform_5(%arg0: i32) -> (i32, i32) {
    %c0_i32 = arith.constant 0 : i32
    %c0_i32_0 = arith.constant 0 : i32
    %c0_i32_1 = arith.constant 0 : i32
    return %c0_i32, %c0_i32_0 : i32, i32
  }
  func.func @transform_6(%arg0: i32) -> (i32, i32) {
    %c0_i32 = arith.constant 0 : i32
    %c0_i32_0 = arith.constant 0 : i32
    %c0_i32_1 = arith.constant 0 : i32
    return %c0_i32, %c0_i32_0 : i32, i32
  }
  func.func @transform_7(%arg0: i32) -> i32 {
    %c0_i32 = arith.constant 0 : i32
    %c0_i32_0 = arith.constant 0 : i32
    return %c0_i32 : i32
  }
  func.func @transform_8(%arg0: i32) -> (i32, i32) {
    %c0_i32 = arith.constant 0 : i32
    %c0_i32_0 = arith.constant 0 : i32
    return %arg0, %c0_i32 : i32, i32
  }
}

</mosaic_0001>

<llo_original>
// kernel: tpu_custom_call.1
$region0: #{tpu_custom_call.1}
  #allocation0 [shape = 'u32[]', space=smem, size = 0x4, offset = 0x4, fixed_abs, tag = 'smem constant byte address 0x4 - core index']
  #allocation1 [shape = 'u32[72,128]{1,0:T(1,128)}', space=vmem, size = 0x9000, scoped, tag = 'internal scratch']
  #allocation2 [shape = 'f32[1]{0:T(128)S(6)}', space=smem, size = 0x200, scoped, tag = 'scoped memory for tpu_custom_call.1']
  %s0 = inlined_call_operand.vmem [shape: f32[16,8,8], index: 0, kind: input, shape index: {}]
  %s1 = inlined_call_operand.vmem [shape: f32[16,8,8], index: 1, kind: input, shape index: {}]
  %s2 = inlined_call_operand.vmem [shape: f32[8,32], index: 2, kind: input, shape index: {}]
  %s3 = inlined_call_operand.vmem [shape: f32[1,32], index: 3, kind: input, shape index: {}]
  %s4 = inlined_call_operand.vmem [shape: f32[32,32], index: 4, kind: input, shape index: {}]
  %s5 = inlined_call_operand.vmem [shape: f32[1,32], index: 5, kind: input, shape index: {}]
  %s6 = inlined_call_operand.vmem [shape: f32[1,32], index: 6, kind: input, shape index: {}]
  %s7 = inlined_call_operand.<no memory space> [shape: f32[1], index: 7, kind: input, shape index: {}]
  %s8 = inlined_call_operand.vmem [shape: f32[16,8], index: 8, kind: output, shape index: {}]
  %s9 = sld [smem:[#allocation0]]
  $region65: #{tpu_custom_call.1} parent=0
    _
  %s11 = ssub.s32 1, %s9
  %s12 = scalar_select 0, %s11, %s9
  %13 = sst [smem:[#allocation2]] %s7
  loop: start=0, step=1, limit=4
  $region2: #{tpu_custom_call.1} parent=0 // loop_pre_header
    _
  $region3: #{tpu_custom_call.1} parent=0 // loop_header
    %s15 = sphi 0, %s19
    %p16 = scmp.ge.s32.totalorder %s15, 4
    %s25 = sphi 0, %s27
    %s28 = sphi 0, %s25
    %s29 = sphi 0, %s28
    %s45 = sphi 0, %s29
    %s51 = sphi 0, %s53
    %s54 = sphi 0, %s51
    %s55 = sphi 0, %s54
    %s71 = sphi 0, %s55
    %s75 = sphi 0, %s75
    %s77 = sphi 0, %s75
    %s78 = sphi 0, %s77
    %s92 = sphi 0, %s78
    %s96 = sphi 0, %s96
    %s98 = sphi 0, %s96
    %s99 = sphi 0, %s98
    %s113 = sphi 0, %s99
    %s117 = sphi 0, %s117
    %s119 = sphi 0, %s117
    %s120 = sphi 0, %s119
    %s134 = sphi 0, %s120
    %s138 = sphi 0, %s138
    %s140 = sphi 0, %s138
    %s141 = sphi 0, %s140
    %s155 = sphi 0, %s141
    %s159 = sphi 0, %s159
    %s161 = sphi 0, %s159
    %s162 = sphi 0, %s161
    %s176 = sphi 0, %s162
    %s180 = sphi 0, %s180
    %s182 = sphi 0, %s180
    %s183 = sphi 0, %s182
    %s197 = sphi 0, %s183
    %s203 = sphi 0, %s205
    %s206 = sphi 0, %s203
    %s207 = sphi 0, %s206
    %s223 = sphi 0, %s207
  $region4: #{tpu_custom_call.1} parent=0 // loop_header_branch
    %18 = sbr.rel (%p16) target = $region8
  $region5: #{tpu_custom_call.1} parent=0 // loop_body
    %s20 = ssub.s32 %s15, 1
    %s21 = ssub.s32 %s15, 2
    %s22 = sadd.s32 %s15, 1
    %s23 = ssub.s32 %s15, %s22
    %p24 = scmp.eq.s32.totalorder %s23, 0
    %s26 = sadd.s32 %s25, 1
    %s27 = scalar_select %p24, %s25, %s26
    %p30 = pneg %p24
    %p31 = scmp.eq.s32.totalorder %s15, 1
    %p32 = por %p30, %p31
    %p33 = scmp.ne.s32.totalorder %s25, %s28
    %p34 = scmp.eq.s32.totalorder %s15, 0
    %p35 = por %p33, %p34
    %p36 = scmp.ne.s32.totalorder %s25, %s28
    %p37 = scmp.eq.s32.totalorder %s20, 1
    %p38 = por %p36, %p37
    %p39 = scmp.ne.s32.totalorder %s28, %s29
    %p40 = scmp.eq.s32.totalorder %s20, 0
    %p41 = por %p39, %p40
    %p42 = scmp.ne.s32.totalorder %s28, %s29
    %p43 = scmp.eq.s32.totalorder %s21, 1
    %p44 = por %p42, %p43
    %p46 = scmp.ne.s32.totalorder %s29, %s45
    %p47 = scmp.eq.s32.totalorder %s21, 0
    %p48 = por %p46, %p47
    %s49 = ssub.s32 %s15, %s22
    %p50 = scmp.eq.s32.totalorder %s49, 0
    %s52 = sadd.s32 %s51, 1
    %s53 = scalar_select %p50, %s51, %s52
    %p56 = pneg %p50
    %p57 = scmp.eq.s32.totalorder %s15, 1
    %p58 = por %p56, %p57
    %p59 = scmp.ne.s32.totalorder %s51, %s54
    %p60 = scmp.eq.s32.totalorder %s15, 0
    %p61 = por %p59, %p60
    %p62 = scmp.ne.s32.totalorder %s51, %s54
    %p63 = scmp.eq.s32.totalorder %s20, 1
    %p64 = por %p62, %p63
    %p65 = scmp.ne.s32.totalorder %s54, %s55
    %p66 = scmp.eq.s32.totalorder %s20, 0
    %p67 = por %p65, %p66
    %p68 = scmp.ne.s32.totalorder %s54, %s55
    %p69 = scmp.eq.s32.totalorder %s21, 1
    %p70 = por %p68, %p69
    %p72 = scmp.ne.s32.totalorder %s55, %s71
    %p73 = scmp.eq.s32.totalorder %s21, 0
    %p74 = por %p72, %p73
    %s76 = sadd.s32 %s75, 1
    %p79 = scmp.eq.s32.totalorder %s15, 1
    %p80 = scmp.ne.s32.totalorder %s75, %s77
    %p81 = scmp.eq.s32.totalorder %s15, 0
    %p82 = por %p80, %p81
    %p83 = scmp.ne.s32.totalorder %s75, %s77
    %p84 = scmp.eq.s32.totalorder %s20, 1
    %p85 = por %p83, %p84
    %p86 = scmp.ne.s32.totalorder %s77, %s78
    %p87 = scmp.eq.s32.totalorder %s20, 0
    %p88 = por %p86, %p87
    %p89 = scmp.ne.s32.totalorder %s77, %s78
    %p90 = scmp.eq.s32.totalorder %s21, 1
    %p91 = por %p89, %p90
    %p93 = scmp.ne.s32.totalorder %s78, %s92
    %p94 = scmp.eq.s32.totalorder %s21, 0
    %p95 = por %p93, %p94
    %s97 = sadd.s32 %s96, 1
    %p100 = scmp.eq.s32.totalorder %s15, 1
    %p101 = scmp.ne.s32.totalorder %s96, %s98
    %p102 = scmp.eq.s32.totalorder %s15, 0
    %p103 = por %p101, %p102
    %p104 = scmp.ne.s32.totalorder %s96, %s98
    %p105 = scmp.eq.s32.totalorder %s20, 1
    %p106 = por %p104, %p105
    %p107 = scmp.ne.s32.totalorder %s98, %s99
    %p108 = scmp.eq.s32.totalorder %s20, 0
    %p109 = por %p107, %p108
    %p110 = scmp.ne.s32.totalorder %s98, %s99
    %p111 = scmp.eq.s32.totalorder %s21, 1
    %p112 = por %p110, %p111
    %p114 = scmp.ne.s32.totalorder %s99, %s113
    %p115 = scmp.eq.s32.totalorder %s21, 0
    %p116 = por %p114, %p115
    %s118 = sadd.s32 %s117, 1
    %p121 = scmp.eq.s32.totalorder %s15, 1
    %p122 = scmp.ne.s32.totalorder %s117, %s119
    %p123 = scmp.eq.s32.totalorder %s15, 0
    %p124 = por %p122, %p123
    %p125 = scmp.ne.s32.totalorder %s117, %s119
    %p126 = scmp.eq.s32.totalorder %s20, 1
    %p127 = por %p125, %p126
    %p128 = scmp.ne.s32.totalorder %s119, %s120
    %p129 = scmp.eq.s32.totalorder %s20, 0
    %p130 = por %p128, %p129
    %p131 = scmp.ne.s32.totalorder %s119, %s120
    %p132 = scmp.eq.s32.totalorder %s21, 1
    %p133 = por %p131, %p132
    %p135 = scmp.ne.s32.totalorder %s120, %s134
    %p136 = scmp.eq.s32.totalorder %s21, 0
    %p137 = por %p135, %p136
    %s139 = sadd.s32 %s138, 1
    %p142 = scmp.eq.s32.totalorder %s15, 1
    %p143 = scmp.ne.s32.totalorder %s138, %s140
    %p144 = scmp.eq.s32.totalorder %s15, 0
    %p145 = por %p143, %p144
    %p146 = scmp.ne.s32.totalorder %s138, %s140
    %p147 = scmp.eq.s32.totalorder %s20, 1
    %p148 = por %p146, %p147
    %p149 = scmp.ne.s32.totalorder %s140, %s141
    %p150 = scmp.eq.s32.totalorder %s20, 0
    %p151 = por %p149, %p150
    %p152 = scmp.ne.s32.totalorder %s140, %s141
    %p153 = scmp.eq.s32.totalorder %s21, 1
    %p154 = por %p152, %p153
    %p156 = scmp.ne.s32.totalorder %s141, %s155
    %p157 = scmp.eq.s32.totalorder %s21, 0
    %p158 = por %p156, %p157
    %s160 = sadd.s32 %s159, 1
    %p163 = scmp.eq.s32.totalorder %s15, 1
    %p164 = scmp.ne.s32.totalorder %s159, %s161
    %p165 = scmp.eq.s32.totalorder %s15, 0
    %p166 = por %p164, %p165
    %p167 = scmp.ne.s32.totalorder %s159, %s161
    %p168 = scmp.eq.s32.totalorder %s20, 1
    %p169 = por %p167, %p168
    %p170 = scmp.ne.s32.totalorder %s161, %s162
    %p171 = scmp.eq.s32.totalorder %s20, 0
    %p172 = por %p170, %p171
    %p173 = scmp.ne.s32.totalorder %s161, %s162
    %p174 = scmp.eq.s32.totalorder %s21, 1
    %p175 = por %p173, %p174
    %p177 = scmp.ne.s32.totalorder %s162, %s176
    %p178 = scmp.eq.s32.totalorder %s21, 0
    %p179 = por %p177, %p178
    %s181 = sadd.s32 %s180, 1
    %p184 = scmp.eq.s32.totalorder %s15, 1
    %p185 = scmp.ne.s32.totalorder %s180, %s182
    %p186 = scmp.eq.s32.totalorder %s15, 0
    %p187 = por %p185, %p186
    %p188 = scmp.ne.s32.totalorder %s180, %s182
    %p189 = scmp.eq.s32.totalorder %s20, 1
    %p190 = por %p188, %p189
    %p191 = scmp.ne.s32.totalorder %s182, %s183
    %p192 = scmp.eq.s32.totalorder %s20, 0
    %p193 = por %p191, %p192
    %p194 = scmp.ne.s32.totalorder %s182, %s183
    %p195 = scmp.eq.s32.totalorder %s21, 1
    %p196 = por %p194, %p195
    %p198 = scmp.ne.s32.totalorder %s183, %s197
    %p199 = scmp.eq.s32.totalorder %s21, 0
    %p200 = por %p198, %p199
    %s201 = ssub.s32 %s15, %s22
    %p202 = scmp.eq.s32.totalorder %s201, 0
    %s204 = sadd.s32 %s203, 1
    %s205 = scalar_select %p202, %s203, %s204
    %p208 = pneg %p202
    %p209 = scmp.eq.s32.totalorder %s15, 1
    %p210 = por %p208, %p209
    %p211 = scmp.ne.s32.totalorder %s203, %s206
    %p212 = scmp.eq.s32.totalorder %s15, 0
    %p213 = por %p211, %p212
    %p214 = scmp.ne.s32.totalorder %s203, %s206
    %p215 = scmp.eq.s32.totalorder %s20, 1
    %p216 = por %p214, %p215
    %p217 = scmp.ne.s32.totalorder %s206, %s207
    %p218 = scmp.eq.s32.totalorder %s20, 0
    %p219 = por %p217, %p218
    %p220 = scmp.ne.s32.totalorder %s206, %s207
    %p221 = scmp.eq.s32.totalorder %s21, 1
    %p222 = por %p220, %p221
    %p224 = scmp.ne.s32.totalorder %s207, %s223
    %p225 = scmp.eq.s32.totalorder %s21, 0
    %p226 = por %p224, %p225
    %p227 = scmp.le.s32.totalorder 1, %s15
    %p228 = scmp.lt.s32.totalorder %s15, 3
    %p229 = pnand %p227, %p228
    %p230 = pneg %p229
    // Predicated region
    $region9: #{tpu_custom_call.1} parent=5 // pred_check
      _
    $region10: #{tpu_custom_call.1} parent=5 // pred_check_branch
      %232 = sbr.rel (%p229) target = $region12
    $region11: #{tpu_custom_call.1} parent=5 // pred_region
      %s233 = ssub.s32 %s15, 1
      // Predicated region
      $region13: #{tpu_custom_call.1} parent=11 // pred_check
        %p234 = pneg %p88
      $region14: #{tpu_custom_call.1} parent=11 // pred_check_branch
        %236 = sbr.rel (%p234) target = $region16
      $region15: #{tpu_custom_call.1} parent=11 // pred_region
        _
      $region16: #{tpu_custom_call.1} parent=11 // pred_fallthru
        _
      // Predicated region
      $region17: #{tpu_custom_call.1} parent=11 // pred_check
        %p237 = pneg %p109
      $region18: #{tpu_custom_call.1} parent=11 // pred_check_branch
        %239 = sbr.rel (%p237) target = $region20
      $region19: #{tpu_custom_call.1} parent=11 // pred_region
        _
      $region20: #{tpu_custom_call.1} parent=11 // pred_fallthru
        _
      // Predicated region
      $region21: #{tpu_custom_call.1} parent=11 // pred_check
        %p240 = pneg %p130
      $region22: #{tpu_custom_call.1} parent=11 // pred_check_branch
        %242 = sbr.rel (%p240) target = $region24
      $region23: #{tpu_custom_call.1} parent=11 // pred_region
        _
      $region24: #{tpu_custom_call.1} parent=11 // pred_fallthru
        _
      // Predicated region
      $region25: #{tpu_custom_call.1} parent=11 // pred_check
        %p243 = pneg %p151
      $region26: #{tpu_custom_call.1} parent=11 // pred_check_branch
        %245 = sbr.rel (%p243) target = $region28
      $region27: #{tpu_custom_call.1} parent=11 // pred_region
        _
      $region28: #{tpu_custom_call.1} parent=11 // pred_fallthru
        _
      // Predicated region
      $region29: #{tpu_custom_call.1} parent=11 // pred_check
        %p246 = pneg %p172
      $region30: #{tpu_custom_call.1} parent=11 // pred_check_branch
        %248 = sbr.rel (%p246) target = $region32
      $region31: #{tpu_custom_call.1} parent=11 // pred_region
        _
      $region32: #{tpu_custom_call.1} parent=11 // pred_fallthru
        _
      // Predicated region
      $region33: #{tpu_custom_call.1} parent=11 // pred_check
        %p249 = pneg %p193
      $region34: #{tpu_custom_call.1} parent=11 // pred_check_branch
        %251 = sbr.rel (%p249) target = $region36
      $region35: #{tpu_custom_call.1} parent=11 // pred_region
        _
      $region36: #{tpu_custom_call.1} parent=11 // pred_fallthru
        _
    $region12: #{tpu_custom_call.1} parent=5 // pred_fallthru
      _
    %p252 = scmp.lt.s32.totalorder %s15, 2
    // Predicated region
    $region37: #{tpu_custom_call.1} parent=5 // pred_check
      %p253 = pneg %p252
    $region38: #{tpu_custom_call.1} parent=5 // pred_check_branch
      %255 = sbr.rel (%p253) target = $region40
    $region39: #{tpu_custom_call.1} parent=5 // pred_region
      // Predicated region
      $region41: #{tpu_custom_call.1} parent=39 // pred_check
        %p256 = pneg %p35
      $region42: #{tpu_custom_call.1} parent=39 // pred_check_branch
        %258 = sbr.rel (%p256) target = $region44
      $region43: #{tpu_custom_call.1} parent=39 // pred_region
        %s259 = smul.u32 8, %s15
        %p260 = scmp.lt.s32.totalorder %s259, 15
        %s261 = scalar_select %p260, %s259, 15
        %s262 = smul.addr %s261, 8
        %s263 = scalar_lea.vmem %s0, %s262
        %s264 = smul.u32 8, %s15
      $region44: #{tpu_custom_call.1} parent=39 // pred_fallthru
        _
      // Predicated region
      $region45: #{tpu_custom_call.1} parent=39 // pred_check
        %p265 = pneg %p61
      $region46: #{tpu_custom_call.1} parent=39 // pred_check_branch
        %267 = sbr.rel (%p265) target = $region48
      $region47: #{tpu_custom_call.1} parent=39 // pred_region
        %s268 = smul.u32 8, %s15
        %p269 = scmp.lt.s32.totalorder %s268, 15
        %s270 = scalar_select %p269, %s268, 15
        %s271 = smul.addr %s270, 8
        %s272 = scalar_lea.vmem %s1, %s271
        %s273 = smul.u32 8, %s15
      $region48: #{tpu_custom_call.1} parent=39 // pred_fallthru
        _
    $region40: #{tpu_custom_call.1} parent=5 // pred_fallthru
      _
    %p274 = scmp.le.s32.totalorder 1, %s15
    %p275 = scmp.lt.s32.totalorder %s15, 3
    %p276 = pnand %p274, %p275
    %p277 = pneg %p276
    // Predicated region
    $region49: #{tpu_custom_call.1} parent=5 // pred_check
      _
    $region50: #{tpu_custom_call.1} parent=5 // pred_check_branch
      %279 = sbr.rel (%p276) target = $region52
    $region51: #{tpu_custom_call.1} parent=5 // pred_region
      %s280 = ssub.s32 %s15, 1
      %s281 = smul.u32 8, %s20
      %p282 = scmp.lt.s32.totalorder %s281, 15
      %s283 = scalar_select %p282, %s281, 15
      %s284 = smul.addr %s283, 8
      %s285 = scalar_lea.vmem %s0, %s284
      %p286 = pneg %p41
      %p287 = pneg %p38
      %s288 = smul.u32 8, %s20
      %p289 = scmp.lt.s32.totalorder %s288, 15
      %s290 = scalar_select %p289, %s288, 15
      %s291 = smul.addr %s290, 8
      %s292 = scalar_lea.vmem %s1, %s291
      %p293 = pneg %p67
      %p294 = pneg %p64
      %p295 = pneg %p88
      %p296 = pneg %p85
      %p297 = pneg %p109
      %p298 = pneg %p106
      %p299 = pneg %p130
      %p300 = pneg %p127
      %p301 = pneg %p151
      %p302 = pneg %p148
      %p303 = pneg %p172
      %p304 = pneg %p169
      %p305 = pneg %p193
      %p306 = pneg %p190
      %p307 = pneg %p219
      %p308 = pneg %p216
      %p309 = scmp.lt.s32.totalorder %s20, 1
      %s310 = scalar_select %p309, %s20, 1
      %s311 = smul.addr %s310, 8
      %s312 = scalar_lea.vmem %s8, %s311
      %s313 = smul.u32 8, %s20
      %p314 = scmp.lt.s32.totalorder %s313, 15
      %s315 = scalar_select %p314, %s313, 15
      %s316 = smul.addr %s315, 8
      %s317 = scalar_lea.vmem %s0, %s316
      %s318 = smul.u32 8, %s20
      %s319 = smul.u32 8, %s20
      %p320 = scmp.lt.s32.totalorder %s319, 15
      %s321 = scalar_select %p320, %s319, 15
      %s322 = smul.addr %s321, 8
      %s323 = scalar_lea.vmem %s1, %s322
      %s324 = smul.u32 8, %s20
      %p325 = scmp.lt.s32.totalorder %s20, 1
      %s326 = scalar_select %p325, %s20, 1
      %s327 = smul.addr %s326, 8
      %s328 = scalar_lea.vmem %s8, %s327
      %v329 = vld [vmem:[%s317] sm:$0xff]
      %v330 = vld [vmem:[%s317 + $0x8] sm:$0xff]
      %v331 = vld [vmem:[%s317 + $0x10] sm:$0xff]
      %v332 = vld [vmem:[%s317 + $0x18] sm:$0xff]
      %v333 = vld [vmem:[%s317 + $0x20] sm:$0xff]
      %v334 = vld [vmem:[%s317 + $0x28] sm:$0xff]
      %v335 = vld [vmem:[%s317 + $0x30] sm:$0xff]
      %v336 = vld [vmem:[%s317 + $0x38] sm:$0xff]
      %v337 = vld [vmem:[%s323] sm:$0xff]
      %v338 = vld [vmem:[%s323 + $0x8] sm:$0xff]
      %v339 = vld [vmem:[%s323 + $0x10] sm:$0xff]
      %v340 = vld [vmem:[%s323 + $0x18] sm:$0xff]
      %v341 = vld [vmem:[%s323 + $0x20] sm:$0xff]
      %v342 = vld [vmem:[%s323 + $0x28] sm:$0xff]
      %v343 = vld [vmem:[%s323 + $0x30] sm:$0xff]
      %v344 = vld [vmem:[%s323 + $0x38] sm:$0xff]
      %v345 = vld [vmem:[%s2] sm:$0xff]
      %v346 = vld [vmem:[%s3] sm:$0x1]
      %v348 = vperm.slane %v346, 0
      %vm350 = vcmask 64512
      %v352 = vsel %vm350, %v329, 0
      %v355 = vsel %vm350, %v330, 0
      %v358 = vsel %vm350, %v331, 0
      %v361 = vsel %vm350, %v332, 0
      %v364 = vsel %vm350, %v333, 0
      %v367 = vsel %vm350, %v334, 0
      %v370 = vsel %vm350, %v335, 0
      %v373 = vsel %vm350, %v336, 0
      %375 = vmatpush.msra.mxu0 0.0
      %376 = vmatpush.msra.mxu0 0.0
      %377 = vmatpush.msra.mxu0 0.0
      %378 = vmatpush.msra.mxu0 0.0
      %379 = vmatpush.msra.mxu0 0.0
      %380 = vmatpush.msra.mxu0 0.0
      %381 = vmatpush.msra.mxu0 0.0
      %382 = vmatpush.msra.mxu0 0.0
      %383 = vmatpush.msra.mxu0 0.0
      %384 = vmatpush.msra.mxu0 0.0
      %385 = vmatpush.msra.mxu0 0.0
      %386 = vmatpush.msra.mxu0 0.0
      %387 = vmatpush.msra.mxu0 0.0
      %388 = vmatpush.msra.mxu0 0.0
      %389 = vmatpush.msra.mxu0 0.0
      %390 = vmatpush.msra.mxu0 %v345
      %391 = vmatmul.f32.gmra.mxu0 %v352
      %v392 = vpop.f32.mrf.mxu0
      %v393 = vadd.f32 %v348, %v392
      %394 = vmatmul.f32.gmra.mxu0 %v355
      %v395 = vpop.f32.mrf.mxu0
      %v396 = vadd.f32 %v348, %v395
      %397 = vmatmul.f32.gmra.mxu0 %v358
      %v398 = vpop.f32.mrf.mxu0
      %v399 = vadd.f32 %v348, %v398
      %400 = vmatmul.f32.gmra.mxu0 %v361
      %v401 = vpop.f32.mrf.mxu0
      %v402 = vadd.f32 %v348, %v401
      %403 = vmatmul.f32.gmra.mxu0 %v364
      %v404 = vpop.f32.mrf.mxu0
      %v405 = vadd.f32 %v348, %v404
      %406 = vmatmul.f32.gmra.mxu0 %v367
      %v407 = vpop.f32.mrf.mxu0
      %v408 = vadd.f32 %v348, %v407
      %409 = vmatmul.f32.gmra.mxu0 %v370
      %v410 = vpop.f32.mrf.mxu0
      %v411 = vadd.f32 %v348, %v410
      %412 = vmatmul.f32.gmra.mxu0 %v373
      %v413 = vpop.f32.mrf.mxu0
      %v414 = vadd.f32 %v348, %v413
      %415 = vdwg.mxu0
      %v417 = vsel %vm350, %v337, 0
      %419 = vmatpush.msra.mxu0 0.0
      %420 = vmatpush.msra.mxu0 0.0
      %421 = vmatpush.msra.mxu0 0.0
      %422 = vmatpush.msra.mxu0 0.0
      %423 = vmatpush.msra.mxu0 0.0
      %424 = vmatpush.msra.mxu0 0.0
      %425 = vmatpush.msra.mxu0 0.0
      %426 = vmatpush.msra.mxu0 0.0
      %427 = vmatpush.msra.mxu0 0.0
      %428 = vmatpush.msra.mxu0 0.0
      %429 = vmatpush.msra.mxu0 0.0
      %430 = vmatpush.msra.mxu0 0.0
      %431 = vmatpush.msra.mxu0 0.0
      %432 = vmatpush.msra.mxu0 0.0
      %433 = vmatpush.msra.mxu0 0.0
      %434 = vmatpush.msra.mxu0 %v393
      %435 = vmatmul.f32.gmra.mxu0 %v417
      %v436 = vpop.f32.mrf.mxu0
      %v437 = vadd.f32 0.0, %v436
      %438 = vdwg.mxu0
      %v440 = vsel %vm350, %v338, 0
      %442 = vmatpush.msra.mxu0 0.0
      %443 = vmatpush.msra.mxu0 0.0
      %444 = vmatpush.msra.mxu0 0.0
      %445 = vmatpush.msra.mxu0 0.0
      %446 = vmatpush.msra.mxu0 0.0
      %447 = vmatpush.msra.mxu0 0.0
      %448 = vmatpush.msra.mxu0 0.0
      %449 = vmatpush.msra.mxu0 0.0
      %450 = vmatpush.msra.mxu0 0.0
      %451 = vmatpush.msra.mxu0 0.0
      %452 = vmatpush.msra.mxu0 0.0
      %453 = vmatpush.msra.mxu0 0.0
      %454 = vmatpush.msra.mxu0 0.0
      %455 = vmatpush.msra.mxu0 0.0
      %456 = vmatpush.msra.mxu0 0.0
      %457 = vmatpush.msra.mxu0 %v396
      %458 = vmatmul.f32.gmra.mxu0 %v440
      %v459 = vpop.f32.mrf.mxu0
      %v460 = vadd.f32 0.0, %v459
      %461 = vdwg.mxu0
      %v463 = vsel %vm350, %v339, 0
      %465 = vmatpush.msra.mxu0 0.0
      %466 = vmatpush.msra.mxu0 0.0
      %467 = vmatpush.msra.mxu0 0.0
      %468 = vmatpush.msra.mxu0 0.0
      %469 = vmatpush.msra.mxu0 0.0
      %470 = vmatpush.msra.mxu0 0.0
      %471 = vmatpush.msra.mxu0 0.0
      %472 = vmatpush.msra.mxu0 0.0
      %473 = vmatpush.msra.mxu0 0.0
      %474 = vmatpush.msra.mxu0 0.0
      %475 = vmatpush.msra.mxu0 0.0
      %476 = vmatpush.msra.mxu0 0.0
      %477 = vmatpush.msra.mxu0 0.0
      %478 = vmatpush.msra.mxu0 0.0
      %479 = vmatpush.msra.mxu0 0.0
      %480 = vmatpush.msra.mxu0 %v399
      %481 = vmatmul.f32.gmra.mxu0 %v463
      %v482 = vpop.f32.mrf.mxu0
      %v483 = vadd.f32 0.0, %v482
      %484 = vdwg.mxu0
      %v486 = vsel %vm350, %v340, 0
      %488 = vmatpush.msra.mxu0 0.0
      %489 = vmatpush.msra.mxu0 0.0
      %490 = vmatpush.msra.mxu0 0.0
      %491 = vmatpush.msra.mxu0 0.0
      %492 = vmatpush.msra.mxu0 0.0
      %493 = vmatpush.msra.mxu0 0.0
      %494 = vmatpush.msra.mxu0 0.0
      %495 = vmatpush.msra.mxu0 0.0
      %496 = vmatpush.msra.mxu0 0.0
      %497 = vmatpush.msra.mxu0 0.0
      %498 = vmatpush.msra.mxu0 0.0
      %499 = vmatpush.msra.mxu0 0.0
      %500 = vmatpush.msra.mxu0 0.0
      %501 = vmatpush.msra.mxu0 0.0
      %502 = vmatpush.msra.mxu0 0.0
      %503 = vmatpush.msra.mxu0 %v402
      %504 = vmatmul.f32.gmra.mxu0 %v486
      %v505 = vpop.f32.mrf.mxu0
      %v506 = vadd.f32 0.0, %v505
      %507 = vdwg.mxu0
      %v509 = vsel %vm350, %v341, 0
      %511 = vmatpush.msra.mxu0 0.0
      %512 = vmatpush.msra.mxu0 0.0
      %513 = vmatpush.msra.mxu0 0.0
      %514 = vmatpush.msra.mxu0 0.0
      %515 = vmatpush.msra.mxu0 0.0
      %516 = vmatpush.msra.mxu0 0.0
      %517 = vmatpush.msra.mxu0 0.0
      %518 = vmatpush.msra.mxu0 0.0
      %519 = vmatpush.msra.mxu0 0.0
      %520 = vmatpush.msra.mxu0 0.0
      %521 = vmatpush.msra.mxu0 0.0
      %522 = vmatpush.msra.mxu0 0.0
      %523 = vmatpush.msra.mxu0 0.0
      %524 = vmatpush.msra.mxu0 0.0
      %525 = vmatpush.msra.mxu0 0.0
      %526 = vmatpush.msra.mxu0 %v405
      %527 = vmatmul.f32.gmra.mxu0 %v509
      %v528 = vpop.f32.mrf.mxu0
      %v529 = vadd.f32 0.0, %v528
      %530 = vdwg.mxu0
      %v532 = vsel %vm350, %v342, 0
      %534 = vmatpush.msra.mxu0 0.0
      %535 = vmatpush.msra.mxu0 0.0
      %536 = vmatpush.msra.mxu0 0.0
      %537 = vmatpush.msra.mxu0 0.0
      %538 = vmatpush.msra.mxu0 0.0
      %539 = vmatpush.msra.mxu0 0.0
      %540 = vmatpush.msra.mxu0 0.0
      %541 = vmatpush.msra.mxu0 0.0
      %542 = vmatpush.msra.mxu0 0.0
      %543 = vmatpush.msra.mxu0 0.0
      %544 = vmatpush.msra.mxu0 0.0
      %545 = vmatpush.msra.mxu0 0.0
      %546 = vmatpush.msra.mxu0 0.0
      %547 = vmatpush.msra.mxu0 0.0
      %548 = vmatpush.msra.mxu0 0.0
      %549 = vmatpush.msra.mxu0 %v408
      %550 = vmatmul.f32.gmra.mxu0 %v532
      %v551 = vpop.f32.mrf.mxu0
      %v552 = vadd.f32 0.0, %v551
      %553 = vdwg.mxu0
      %v555 = vsel %vm350, %v343, 0
      %557 = vmatpush.msra.mxu0 0.0
      %558 = vmatpush.msra.mxu0 0.0
      %559 = vmatpush.msra.mxu0 0.0
      %560 = vmatpush.msra.mxu0 0.0
      %561 = vmatpush.msra.mxu0 0.0
      %562 = vmatpush.msra.mxu0 0.0
      %563 = vmatpush.msra.mxu0 0.0
      %564 = vmatpush.msra.mxu0 0.0
      %565 = vmatpush.msra.mxu0 0.0
      %566 = vmatpush.msra.mxu0 0.0
      %567 = vmatpush.msra.mxu0 0.0
      %568 = vmatpush.msra.mxu0 0.0
      %569 = vmatpush.msra.mxu0 0.0
      %570 = vmatpush.msra.mxu0 0.0
      %571 = vmatpush.msra.mxu0 0.0
      %572 = vmatpush.msra.mxu0 %v411
      %573 = vmatmul.f32.gmra.mxu0 %v555
      %v574 = vpop.f32.mrf.mxu0
      %v575 = vadd.f32 0.0, %v574
      %576 = vdwg.mxu0
      %v578 = vsel %vm350, %v344, 0
      %580 = vmatpush.msra.mxu0 0.0
      %581 = vmatpush.msra.mxu0 0.0
      %582 = vmatpush.msra.mxu0 0.0
      %583 = vmatpush.msra.mxu0 0.0
      %584 = vmatpush.msra.mxu0 0.0
      %585 = vmatpush.msra.mxu0 0.0
      %586 = vmatpush.msra.mxu0 0.0
      %587 = vmatpush.msra.mxu0 0.0
      %588 = vmatpush.msra.mxu0 0.0
      %589 = vmatpush.msra.mxu0 0.0
      %590 = vmatpush.msra.mxu0 0.0
      %591 = vmatpush.msra.mxu0 0.0
      %592 = vmatpush.msra.mxu0 0.0
      %593 = vmatpush.msra.mxu0 0.0
      %594 = vmatpush.msra.mxu0 0.0
      %595 = vmatpush.msra.mxu0 %v414
      %596 = vmatmul.f32.gmra.mxu0 %v578
      %v597 = vpop.f32.mrf.mxu0
      %v598 = vadd.f32 0.0, %v597
      %599 = vdwg.mxu0
      %v600 = vtanh.pop %v437
      %v601 = vtanh.pop %v460
      %v602 = vtanh.pop %v483
      %v603 = vtanh.pop %v506
      %v604 = vtanh.pop %v529
      %v605 = vtanh.pop %v552
      %v606 = vtanh.pop %v575
      %v607 = vtanh.pop %v598
      %v608 = vld [vmem:[%s4] sm:$0xff]
      %v609 = vld [vmem:[%s4 + $0x8] sm:$0xff]
      %v610 = vld [vmem:[%s4 + $0x10] sm:$0xff]
      %v611 = vld [vmem:[%s4 + $0x18] sm:$0xff]
      %v612 = vld [vmem:[%s5] sm:$0x1]
      %v614 = vperm.slane %v612, 0
      %vm616 = vcmask 261120
      %v618 = vsel %vm616, %v600, 0
      %v621 = vsel %vm616, %v601, 0
      %v624 = vsel %vm616, %v602, 0
      %v627 = vsel %vm616, %v603, 0
      %v630 = vsel %vm616, %v604, 0
      %v633 = vsel %vm616, %v605, 0
      %v636 = vsel %vm616, %v606, 0
      %v639 = vsel %vm616, %v607, 0
      %641 = vmatpush.msra.mxu0 0.0
      %642 = vmatpush.msra.mxu0 0.0
      %643 = vmatpush.msra.mxu0 0.0
      %644 = vmatpush.msra.mxu0 0.0
      %645 = vmatpush.msra.mxu0 0.0
      %646 = vmatpush.msra.mxu0 0.0
      %647 = vmatpush.msra.mxu0 0.0
      %648 = vmatpush.msra.mxu0 0.0
      %649 = vmatpush.msra.mxu0 0.0
      %650 = vmatpush.msra.mxu0 0.0
      %651 = vmatpush.msra.mxu0 0.0
      %652 = vmatpush.msra.mxu0 0.0
      %653 = vmatpush.msra.mxu0 %v611
      %654 = vmatpush.msra.mxu0 %v610
      %655 = vmatpush.msra.mxu0 %v609
      %656 = vmatpush.msra.mxu0 %v608
      %657 = vmatmul.f32.gmra.mxu0 %v618
      %v658 = vpop.f32.mrf.mxu0
      %v659 = vadd.f32 %v614, %v658
      %660 = vmatmul.f32.gmra.mxu0 %v621
      %v661 = vpop.f32.mrf.mxu0
      %v662 = vadd.f32 %v614, %v661
      %663 = vmatmul.f32.gmra.mxu0 %v624
      %v664 = vpop.f32.mrf.mxu0
      %v665 = vadd.f32 %v614, %v664
      %666 = vmatmul.f32.gmra.mxu0 %v627
      %v667 = vpop.f32.mrf.mxu0
      %v668 = vadd.f32 %v614, %v667
      %669 = vmatmul.f32.gmra.mxu0 %v630
      %v670 = vpop.f32.mrf.mxu0
      %v671 = vadd.f32 %v614, %v670
      %672 = vmatmul.f32.gmra.mxu0 %v633
      %v673 = vpop.f32.mrf.mxu0
      %v674 = vadd.f32 %v614, %v673
      %675 = vmatmul.f32.gmra.mxu0 %v636
      %v676 = vpop.f32.mrf.mxu0
      %v677 = vadd.f32 %v614, %v676
      %678 = vmatmul.f32.gmra.mxu0 %v639
      %v679 = vpop.f32.mrf.mxu0
      %v680 = vadd.f32 %v614, %v679
      %681 = vdwg.mxu0
      %682 = vmatpush.msra.mxu0 0.0
      %683 = vmatpush.msra.mxu0 0.0
      %684 = vmatpush.msra.mxu0 0.0
      %685 = vmatpush.msra.mxu0 0.0
      %686 = vmatpush.msra.mxu0 0.0
      %687 = vmatpush.msra.mxu0 0.0
      %688 = vmatpush.msra.mxu0 0.0
      %689 = vmatpush.msra.mxu0 0.0
      %690 = vmatpush.msra.mxu0 0.0
      %691 = vmatpush.msra.mxu0 0.0
      %692 = vmatpush.msra.mxu0 0.0
      %693 = vmatpush.msra.mxu0 0.0
      %694 = vmatpush.msra.mxu0 0.0
      %695 = vmatpush.msra.mxu0 0.0
      %696 = vmatpush.msra.mxu0 0.0
      %697 = vmatpush.msra.mxu0 %v659
      %698 = vmatmul.f32.gmra.mxu0 %v417
      %v699 = vpop.f32.mrf.mxu0
      %v700 = vadd.f32 0.0, %v699
      %701 = vdwg.mxu0
      %702 = vmatpush.msra.mxu0 0.0
      %703 = vmatpush.msra.mxu0 0.0
      %704 = vmatpush.msra.mxu0 0.0
      %705 = vmatpush.msra.mxu0 0.0
      %706 = vmatpush.msra.mxu0 0.0
      %707 = vmatpush.msra.mxu0 0.0
      %708 = vmatpush.msra.mxu0 0.0
      %709 = vmatpush.msra.mxu0 0.0
      %710 = vmatpush.msra.mxu0 0.0
      %711 = vmatpush.msra.mxu0 0.0
      %712 = vmatpush.msra.mxu0 0.0
      %713 = vmatpush.msra.mxu0 0.0
      %714 = vmatpush.msra.mxu0 0.0
      %715 = vmatpush.msra.mxu0 0.0
      %716 = vmatpush.msra.mxu0 0.0
      %717 = vmatpush.msra.mxu0 %v662
      %718 = vmatmul.f32.gmra.mxu0 %v440
      %v719 = vpop.f32.mrf.mxu0
      %v720 = vadd.f32 0.0, %v719
      %721 = vdwg.mxu0
      %722 = vmatpush.msra.mxu0 0.0
      %723 = vmatpush.msra.mxu0 0.0
      %724 = vmatpush.msra.mxu0 0.0
      %725 = vmatpush.msra.mxu0 0.0
      %726 = vmatpush.msra.mxu0 0.0
      %727 = vmatpush.msra.mxu0 0.0
      %728 = vmatpush.msra.mxu0 0.0
      %729 = vmatpush.msra.mxu0 0.0
      %730 = vmatpush.msra.mxu0 0.0
      %731 = vmatpush.msra.mxu0 0.0
      %732 = vmatpush.msra.mxu0 0.0
      %733 = vmatpush.msra.mxu0 0.0
      %734 = vmatpush.msra.mxu0 0.0
      %735 = vmatpush.msra.mxu0 0.0
      %736 = vmatpush.msra.mxu0 0.0
      %737 = vmatpush.msra.mxu0 %v665
      %738 = vmatmul.f32.gmra.mxu0 %v463
      %v739 = vpop.f32.mrf.mxu0
      %v740 = vadd.f32 0.0, %v739
      %741 = vdwg.mxu0
      %742 = vmatpush.msra.mxu0 0.0
      %743 = vmatpush.msra.mxu0 0.0
      %744 = vmatpush.msra.mxu0 0.0
      %745 = vmatpush.msra.mxu0 0.0
      %746 = vmatpush.msra.mxu0 0.0
      %747 = vmatpush.msra.mxu0 0.0
      %748 = vmatpush.msra.mxu0 0.0
      %749 = vmatpush.msra.mxu0 0.0
      %750 = vmatpush.msra.mxu0 0.0
      %751 = vmatpush.msra.mxu0 0.0
      %752 = vmatpush.msra.mxu0 0.0
      %753 = vmatpush.msra.mxu0 0.0
      %754 = vmatpush.msra.mxu0 0.0
      %755 = vmatpush.msra.mxu0 0.0
      %756 = vmatpush.msra.mxu0 0.0
      %757 = vmatpush.msra.mxu0 %v668
      %758 = vmatmul.f32.gmra.mxu0 %v486
      %v759 = vpop.f32.mrf.mxu0
      %v760 = vadd.f32 0.0, %v759
      %761 = vdwg.mxu0
      %762 = vmatpush.msra.mxu0 0.0
      %763 = vmatpush.msra.mxu0 0.0
      %764 = vmatpush.msra.mxu0 0.0
      %765 = vmatpush.msra.mxu0 0.0
      %766 = vmatpush.msra.mxu0 0.0
      %767 = vmatpush.msra.mxu0 0.0
      %768 = vmatpush.msra.mxu0 0.0
      %769 = vmatpush.msra.mxu0 0.0
      %770 = vmatpush.msra.mxu0 0.0
      %771 = vmatpush.msra.mxu0 0.0
      %772 = vmatpush.msra.mxu0 0.0
      %773 = vmatpush.msra.mxu0 0.0
      %774 = vmatpush.msra.mxu0 0.0
      %775 = vmatpush.msra.mxu0 0.0
      %776 = vmatpush.msra.mxu0 0.0
      %777 = vmatpush.msra.mxu0 %v671
      %778 = vmatmul.f32.gmra.mxu0 %v509
      %v779 = vpop.f32.mrf.mxu0
      %v780 = vadd.f32 0.0, %v779
      %781 = vdwg.mxu0
      %782 = vmatpush.msra.mxu0 0.0
      %783 = vmatpush.msra.mxu0 0.0
      %784 = vmatpush.msra.mxu0 0.0
      %785 = vmatpush.msra.mxu0 0.0
      %786 = vmatpush.msra.mxu0 0.0
      %787 = vmatpush.msra.mxu0 0.0
      %788 = vmatpush.msra.mxu0 0.0
      %789 = vmatpush.msra.mxu0 0.0
      %790 = vmatpush.msra.mxu0 0.0
      %791 = vmatpush.msra.mxu0 0.0
      %792 = vmatpush.msra.mxu0 0.0
      %793 = vmatpush.msra.mxu0 0.0
      %794 = vmatpush.msra.mxu0 0.0
      %795 = vmatpush.msra.mxu0 0.0
      %796 = vmatpush.msra.mxu0 0.0
      %797 = vmatpush.msra.mxu0 %v674
      %798 = vmatmul.f32.gmra.mxu0 %v532
      %v799 = vpop.f32.mrf.mxu0
      %v800 = vadd.f32 0.0, %v799
      %801 = vdwg.mxu0
      %802 = vmatpush.msra.mxu0 0.0
      %803 = vmatpush.msra.mxu0 0.0
      %804 = vmatpush.msra.mxu0 0.0
      %805 = vmatpush.msra.mxu0 0.0
      %806 = vmatpush.msra.mxu0 0.0
      %807 = vmatpush.msra.mxu0 0.0
      %808 = vmatpush.msra.mxu0 0.0
      %809 = vmatpush.msra.mxu0 0.0
      %810 = vmatpush.msra.mxu0 0.0
      %811 = vmatpush.msra.mxu0 0.0
      %812 = vmatpush.msra.mxu0 0.0
      %813 = vmatpush.msra.mxu0 0.0
      %814 = vmatpush.msra.mxu0 0.0
      %815 = vmatpush.msra.mxu0 0.0
      %816 = vmatpush.msra.mxu0 0.0
      %817 = vmatpush.msra.mxu0 %v677
      %818 = vmatmul.f32.gmra.mxu0 %v555
      %v819 = vpop.f32.mrf.mxu0
      %v820 = vadd.f32 0.0, %v819
      %821 = vdwg.mxu0
      %822 = vmatpush.msra.mxu0 0.0
      %823 = vmatpush.msra.mxu0 0.0
      %824 = vmatpush.msra.mxu0 0.0
      %825 = vmatpush.msra.mxu0 0.0
      %826 = vmatpush.msra.mxu0 0.0
      %827 = vmatpush.msra.mxu0 0.0
      %828 = vmatpush.msra.mxu0 0.0
      %829 = vmatpush.msra.mxu0 0.0
      %830 = vmatpush.msra.mxu0 0.0
      %831 = vmatpush.msra.mxu0 0.0
      %832 = vmatpush.msra.mxu0 0.0
      %833 = vmatpush.msra.mxu0 0.0
      %834 = vmatpush.msra.mxu0 0.0
      %835 = vmatpush.msra.mxu0 0.0
      %836 = vmatpush.msra.mxu0 0.0
      %837 = vmatpush.msra.mxu0 %v680
      %838 = vmatmul.f32.gmra.mxu0 %v578
      %v839 = vpop.f32.mrf.mxu0
      %v840 = vadd.f32 0.0, %v839
      %841 = vdwg.mxu0
      %v842 = vtanh.pop %v700
      %v843 = vtanh.pop %v720
      %v844 = vtanh.pop %v740
      %v845 = vtanh.pop %v760
      %v846 = vtanh.pop %v780
      %v847 = vtanh.pop %v800
      %v848 = vtanh.pop %v820
      %v849 = vtanh.pop %v840
      %v850 = vld [vmem:[%s6] sm:$0x1]
      %v852 = vperm.slane %v850, 0
      %v854 = vmul.f32 %v842, %v852
      %v855 = vmul.f32 %v843, %v852
      %v856 = vmul.f32 %v844, %v852
      %v857 = vmul.f32 %v845, %v852
      %v858 = vmul.f32 %v846, %v852
      %v859 = vmul.f32 %v847, %v852
      %v860 = vmul.f32 %v848, %v852
      %v861 = vmul.f32 %v849, %v852
      %v862 = vsel %vm616, %v854, 0.0
      %863 = vadd.xlane.f32.xlu0 %v862
      %v864 = vpop.xlane.xlu0 %863
      %v865 = vsel %vm616, %v855, 0.0
      %866 = vadd.xlane.f32.xlu0 %v865
      %v867 = vpop.xlane.xlu0 %866
      %v868 = vsel %vm616, %v856, 0.0
      %869 = vadd.xlane.f32.xlu0 %v868
      %v870 = vpop.xlane.xlu0 %869
      %v871 = vsel %vm616, %v857, 0.0
      %872 = vadd.xlane.f32.xlu0 %v871
      %v873 = vpop.xlane.xlu0 %872
      %v874 = vsel %vm616, %v858, 0.0
      %875 = vadd.xlane.f32.xlu0 %v874
      %v876 = vpop.xlane.xlu0 %875
      %v877 = vsel %vm616, %v859, 0.0
      %878 = vadd.xlane.f32.xlu0 %v877
      %v879 = vpop.xlane.xlu0 %878
      %v880 = vsel %vm616, %v860, 0.0
      %881 = vadd.xlane.f32.xlu0 %v880
      %v882 = vpop.xlane.xlu0 %881
      %v883 = vsel %vm616, %v861, 0.0
      %884 = vadd.xlane.f32.xlu0 %v883
      %v885 = vpop.xlane.xlu0 %884
      %s886 = sld [smem:[#allocation2]]
      %v887 = vstv %s886
      %v888 = vadd.f32 %v864, %v887
      %v889 = vadd.f32 %v867, %v887
      %v890 = vadd.f32 %v870, %v887
      %v891 = vadd.f32 %v873, %v887
      %v892 = vadd.f32 %v876, %v887
      %v893 = vadd.f32 %v879, %v887
      %v894 = vadd.f32 %v882, %v887
      %v895 = vadd.f32 %v885, %v887
      %v904 = vlaneseq
      %v905 = vand.u32 %v904, 127
      %v906 = vperm.slane %v888, %v905
      %v907 = vperm.slane %v889, %v905
      %v908 = vperm.slane %v890, %v905
      %v909 = vperm.slane %v891, %v905
      %v910 = vperm.slane %v892, %v905
      %v911 = vperm.slane %v893, %v905
      %v912 = vperm.slane %v894, %v905
      %v913 = vperm.slane %v895, %v905
      %vm914 = vcmask 1041409
      %v915 = vsel %vm914, %v907, %v906
      %vm916 = vcmask 1042434
      %v917 = vsel %vm916, %v908, %v915
      %vm918 = vcmask 1043459
      %v919 = vsel %vm918, %v909, %v917
      %vm920 = vcmask 1044484
      %v921 = vsel %vm920, %v910, %v919
      %vm922 = vcmask 1045509
      %v923 = vsel %vm922, %v911, %v921
      %vm924 = vcmask 1046534
      %v925 = vsel %vm924, %v912, %v923
      %vm926 = vcmask 1047559
      %v927 = vsel %vm926, %v913, %v925
      %929 = vst.msk [vmem:[%s328] sm:$0xff] %vm350, %v927
      %p930 = scmp.lt.s32.totalorder %s20, 1
      %s931 = scalar_select %p930, %s20, 1
      %s932 = smul.addr %s931, 8
      %s933 = scalar_lea.vmem %s8, %s932
      // Predicated region
      $region53: #{tpu_custom_call.1} parent=51 // pred_check
        %p934 = pneg %p216
      $region54: #{tpu_custom_call.1} parent=51 // pred_check_branch
        %936 = sbr.rel (%p934) target = $region56
      $region55: #{tpu_custom_call.1} parent=51 // pred_region
        _
      $region56: #{tpu_custom_call.1} parent=51 // pred_fallthru
        _
    $region52: #{tpu_custom_call.1} parent=5 // pred_fallthru
      _
    %p937 = scmp.le.s32.totalorder 2, %s15
    // Predicated region
    $region57: #{tpu_custom_call.1} parent=5 // pred_check
      %p938 = pneg %p937
    $region58: #{tpu_custom_call.1} parent=5 // pred_check_branch
      %940 = sbr.rel (%p938) target = $region60
    $region59: #{tpu_custom_call.1} parent=5 // pred_region
      %s941 = ssub.s32 %s15, 2
      // Predicated region
      $region61: #{tpu_custom_call.1} parent=59 // pred_check
        %p942 = pneg %p222
      $region62: #{tpu_custom_call.1} parent=59 // pred_check_branch
        %944 = sbr.rel (%p942) target = $region64
      $region63: #{tpu_custom_call.1} parent=59 // pred_region
        %p945 = scmp.lt.s32.totalorder %s21, 1
        %s946 = scalar_select %p945, %s21, 1
        %s947 = smul.addr %s946, 8
        %s948 = scalar_lea.vmem %s8, %s947
      $region64: #{tpu_custom_call.1} parent=59 // pred_fallthru
        _
    $region60: #{tpu_custom_call.1} parent=5 // pred_fallthru
      _
  $region6: #{tpu_custom_call.1} parent=0 // loop_footer
    %s19 = sadd.s32 1, %s15
  $region7: #{tpu_custom_call.1} parent=0 // loop_footer_branch
    %14 = sbr.rel target = $region3
  $region8: #{tpu_custom_call.1} parent=0 // loop_exit
    _

</llo_original>
